<compile_context>
chip_gen: v5e
topology: v5e:2x2
jax: 0.10.0
libtpu: 0.0.40
codegen_flags: <defaults>
</compile_context>

<pallas_src>
import functools

import jax
import jax.numpy as jnp
from jax.experimental import pallas as pl
from jax.experimental.pallas import tpu as pltpu


def _attention_kernel(k_ref, q_ref, wk_ref, bk_ref, wq_ref, bq_ref,
                      wp_ref, bp_ref, out_ref, score_ref, *, k_len, q_len):
    f32 = jnp.float32
    bf16 = jnp.bfloat16

    bt = k_ref.shape[0] // k_len          # batch elements handled this step

    k = k_ref[...].astype(bf16)           # (BT*K, E)
    q = q_ref[...].astype(bf16)           # (BT*Q, E)
    wk = wk_ref[...].astype(bf16)         # (E, H)
    wq = wq_ref[...].astype(bf16)         # (E, H)
    wp = wp_ref[...].astype(bf16)         # (H, O)
    bk = bk_ref[...].astype(f32)          # (1, H)
    bq = bq_ref[...].astype(f32)          # (1, H)
    bp = bp_ref[...].astype(f32)          # (1, O)

    # Linear projections: one big MXU matmul each (bf16 in, f32 accumulate).
    kx = jnp.dot(k, wk, preferred_element_type=f32) + bk     # (BT*K, H) f32
    qx = jnp.dot(q, wq, preferred_element_type=f32) + bq     # (BT*Q, H) f32

    hidden = kx.shape[-1]
    kx_b = kx.reshape(bt, k_len, hidden).astype(bf16)        # (BT, K, H)
    qx_b = qx.reshape(bt, q_len, hidden).astype(bf16)        # (BT, Q, H)

    # dot_product score: contract over H on both sides -> no kx^T materialized.
    score = jnp.einsum('bqh,bkh->bqk', qx_b, kx_b,
                       preferred_element_type=f32)            # (BT, Q, K) f32

    # Numerically-stable softmax over K; denominator via EUP approx reciprocal.
    score = score - jnp.max(score, axis=-1, keepdims=True)
    score = jnp.exp(score)
    score = score * pl.reciprocal(
        jnp.sum(score, axis=-1, keepdims=True), approx=True)

    # Context: score @ kx per batch element (batched contraction on the MXU).
    ctx = jnp.einsum('bqk,bkh->bqh', score.astype(bf16), kx_b,
                     preferred_element_type=f32)              # (BT, Q, H) f32

    # Output projection as one (BT*Q, H) @ (H, O) matmul.
    out = jnp.dot(ctx.reshape(bt * q_len, hidden).astype(bf16), wp,
                  preferred_element_type=f32) + bp            # (BT*Q, O)

    out_ref[...] = out.astype(out_ref.dtype)
    score_ref[...] = score.astype(score_ref.dtype)


def _pick_batch_tile(batch, k_len, q_len):
    """Largest divisor of `batch` giving roughly <=256 rows per projection
    matmul; falls back to the full batch if sublane alignment would break."""
    target = max(1, 256 // max(k_len, q_len))
    bt = min(batch, target)
    while batch % bt:
        bt -= 1
    # Blocks smaller than the full array need 8-aligned sublane counts.
    if bt != batch and ((bt * k_len) % 8 or (bt * q_len) % 8):
        bt = batch
    return bt


def attention_forward(k, q, params, batch_tile=None):
    """k: (B, K, E), q: (B, Q, E). Returns (output (B, Q, O), score (B, Q, K))."""
    if k.ndim == 2:
        k = k[:, None, :]
    if q.ndim == 2:
        q = q[:, None, :]
    B, K, E = k.shape
    _, Q, _ = q.shape
    wk, bk, wq, bq, wp, bp = params
    O = wp.shape[1]

    bt = _pick_batch_tile(B, K, Q) if batch_tile is None else batch_tile
    assert B % bt == 0
    grid = (B // bt,)

    # Free contiguous reshapes: expose batch*seq rows so the in-kernel
    # projections are single large matmuls.
    k2d = k.reshape(B * K, E)
    q2d = q.reshape(B * Q, E)

    out_shape = (
        jax.ShapeDtypeStruct((B * Q, O), jnp.float32),   # output rows
        jax.ShapeDtypeStruct((B, Q, K), jnp.float32),    # attention score
        # TODO(synk): score could be emitted as bfloat16 to halve HBM
        # writeback when Q*K is large.
    )

    # Whole-array VMEM residency for the (small) weights: no per-step DMA,
    # no double-buffering of constant-index blocks.
    weight_spec = pl.BlockSpec(memory_space=pltpu.MemorySpace.VMEM)

    kernel = functools.partial(_attention_kernel, k_len=K, q_len=Q)

    out2d, score = pl.pallas_call(
        kernel,
        out_shape=out_shape,
        grid=grid,
        in_specs=[
            pl.BlockSpec((bt * K, E), lambda i: (i, 0)),   # k rows
            pl.BlockSpec((bt * Q, E), lambda i: (i, 0)),   # q rows
            weight_spec,   # Wk
            weight_spec,   # bk
            weight_spec,   # Wq
            weight_spec,   # bq
            weight_spec,   # Wp
            weight_spec,   # bp
        ],
        out_specs=(
            pl.BlockSpec((bt * Q, O), lambda i: (i, 0)),
            pl.BlockSpec((bt, Q, K), lambda i: (i, 0, 0)),
        ),
        compiler_params=pltpu.CompilerParams(
            # Batch tiles are independent: shards across the 2 TensorCores on
            # v7x when grid > 1; a serial (but overhead-amortized) loop on
            # single-TC v5e/v6e.
            dimension_semantics=("parallel",)),
    )(k2d, q2d, wk, bk, wq, bq, wp, bp)

    return out2d.reshape(B, Q, O), score


def init_params(key, embed_dim, hidden_dim, out_dim):
    """Deterministic init mimicking nn.Linear default (uniform +-1/sqrt(fan_in)).
    Weights stored as [in, out] (transposed vs PyTorch)."""
    ks = jax.random.split(key, 6)

    def lin(kw, kb, fan_in, fan_out):
        bound = 1.0 / jnp.sqrt(fan_in)
        w = jax.random.uniform(kw, (fan_in, fan_out), jnp.float32, -bound, bound)
        b = jax.random.uniform(kb, (1, fan_out), jnp.float32, -bound, bound)
        return w, b

    wk, bk = lin(ks[0], ks[1], embed_dim, hidden_dim)
    wq, bq = lin(ks[2], ks[3], embed_dim, hidden_dim)
    wp, bp = lin(ks[4], ks[5], hidden_dim, out_dim)
    return wk, bk, wq, bq, wp, bp


def reference_forward(k, q, params, compute_dtype=jnp.float32):
    """Pure-JAX reference. With compute_dtype=bfloat16 it mirrors the kernel's
    precision recipe (bf16 matmul operands, f32 accumulation)."""
    wk, bk, wq, bq, wp, bp = params
    c = lambda x: x.astype(compute_dtype)
    f32 = jnp.float32
    kx = jnp.einsum('bke,eh->bkh', c(k), c(wk), preferred_element_type=f32) + bk
    qx = jnp.einsum('bqe,eh->bqh', c(q), c(wq), preferred_element_type=f32) + bq
    score = jnp.einsum('bqh,bkh->bqk', c(qx), c(kx), preferred_element_type=f32)
    score = jax.nn.softmax(score, axis=-1)
    ctx = jnp.einsum('bqk,bkh->bqh', c(score), c(kx), preferred_element_type=f32)
    out = jnp.einsum('bqh,ho->bqo', c(ctx), c(wp), preferred_element_type=f32) + bp
    return out, score


if __name__ == "__main__":
    # Shapes consistent with the module defaults: embed_dim=32, n_head=1,
    # hidden_dim = embed_dim // n_head = 32, out_dim = embed_dim = 32.
    B, K_LEN, Q_LEN, E = 2, 8, 8, 32
    H, O = E, E

    key = jax.random.PRNGKey(0)
    k_key, q_key, p_key = jax.random.split(key, 3)
    k = jax.random.normal(k_key, (B, K_LEN, E), jnp.float32)
    q = jax.random.normal(q_key, (B, Q_LEN, E), jnp.float32)
    params = init_params(p_key, E, H, O)

    out, score = attention_forward(k, q, params)
    out = jax.block_until_ready(out)
    score = jax.block_until_ready(score)

    # Tight check against a reference that mirrors the kernel precision
    # (bf16 MXU operands, f32 accumulation).
    ref_out, ref_score = reference_forward(k, q, params,
                                           compute_dtype=jnp.bfloat16)
    assert jnp.allclose(out, ref_out, atol=1e-2, rtol=1e-2)
    assert jnp.allclose(score, ref_score, atol=1e-2, rtol=1e-2)

    # Loose semantic check against the full-f32 reference (gap is only bf16
    # rounding of the matmul operands + approx reciprocal in the softmax).
    ref_out32, ref_score32 = reference_forward(k, q, params)
    assert jnp.allclose(out, ref_out32, atol=1e-1, rtol=1e-1)
    assert jnp.allclose(score, ref_score32, atol=1e-1, rtol=1e-1)

    # TODO(synk): dropout is identity for p=0 (module default); a non-zero p
    # would need pltpu.prng_seed + pltpu.stateful_bernoulli in the kernel.
    # TODO(synk): only score_function='dot_product' and n_head=1 (the module
    # defaults) are implemented; 'mlp'/'bi_linear'/multi-head are not.
    print("KERNEL_OK")
</pallas_src>

<mosaic_0001>
module attributes {stable_mosaic.version = 11 : i64} {
  func.func @_attention_kernel(%arg0: i32, %arg1: memref<16x32xf32, #tpu.memory_space<vmem>>, %arg2: memref<16x32xf32, #tpu.memory_space<vmem>>, %arg3: memref<32x32xf32, #tpu.memory_space<vmem>>, %arg4: memref<1x32xf32, #tpu.memory_space<vmem>>, %arg5: memref<32x32xf32, #tpu.memory_space<vmem>>, %arg6: memref<1x32xf32, #tpu.memory_space<vmem>>, %arg7: memref<32x32xf32, #tpu.memory_space<vmem>>, %arg8: memref<1x32xf32, #tpu.memory_space<vmem>>, %arg9: memref<16x32xf32, #tpu.memory_space<vmem>>, %arg10: memref<2x8x8xf32, #tpu.memory_space<vmem>>) attributes {dimension_semantics = [#tpu.dimension_semantics<parallel>], iteration_bounds = array<i64: 1>, scalar_prefetch = 0 : i64, scratch_operands = 0 : i64, tpu.core_type = #tpu.core_type<tc>, window_params = [{transform_indices = @transform_0, window_bounds = array<i64: 16, 32>}, {transform_indices = @transform_1, window_bounds = array<i64: 16, 32>}, {pipeline_mode = #tpu.pipeline_mode<synchronous>, transform_indices = @transform_2, window_bounds = array<i64: 32, 32>}, {pipeline_mode = #tpu.pipeline_mode<synchronous>, transform_indices = @transform_3, window_bounds = array<i64: 1, 32>}, {pipeline_mode = #tpu.pipeline_mode<synchronous>, transform_indices = @transform_4, window_bounds = array<i64: 32, 32>}, {pipeline_mode = #tpu.pipeline_mode<synchronous>, transform_indices = @transform_5, window_bounds = array<i64: 1, 32>}, {pipeline_mode = #tpu.pipeline_mode<synchronous>, transform_indices = @transform_6, window_bounds = array<i64: 32, 32>}, {pipeline_mode = #tpu.pipeline_mode<synchronous>, transform_indices = @transform_7, window_bounds = array<i64: 1, 32>}, {transform_indices = @transform_8, window_bounds = array<i64: 16, 32>}, {transform_indices = @transform_9, window_bounds = array<i64: 2, 8, 8>}]} {
    %c0 = arith.constant 0 : index
    %c0_0 = arith.constant 0 : index
    %0 = vector.load %arg1[%c0, %c0_0] : memref<16x32xf32, #tpu.memory_space<vmem>>, vector<16x32xf32>
    %1 = arith.truncf %0 : vector<16x32xf32> to vector<16x32xbf16>
    %c0_1 = arith.constant 0 : index
    %c0_2 = arith.constant 0 : index
    %2 = vector.load %arg2[%c0_1, %c0_2] : memref<16x32xf32, #tpu.memory_space<vmem>>, vector<16x32xf32>
    %3 = arith.truncf %2 : vector<16x32xf32> to vector<16x32xbf16>
    %c0_3 = arith.constant 0 : index
    %c0_4 = arith.constant 0 : index
    %4 = vector.load %arg3[%c0_3, %c0_4] : memref<32x32xf32, #tpu.memory_space<vmem>>, vector<32x32xf32>
    %5 = arith.truncf %4 : vector<32x32xf32> to vector<32x32xbf16>
    %c0_5 = arith.constant 0 : index
    %c0_6 = arith.constant 0 : index
    %6 = vector.load %arg5[%c0_5, %c0_6] : memref<32x32xf32, #tpu.memory_space<vmem>>, vector<32x32xf32>
    %7 = arith.truncf %6 : vector<32x32xf32> to vector<32x32xbf16>
    %c0_7 = arith.constant 0 : index
    %c0_8 = arith.constant 0 : index
    %8 = vector.load %arg7[%c0_7, %c0_8] : memref<32x32xf32, #tpu.memory_space<vmem>>, vector<32x32xf32>
    %9 = arith.truncf %8 : vector<32x32xf32> to vector<32x32xbf16>
    %c0_9 = arith.constant 0 : index
    %c0_10 = arith.constant 0 : index
    %10 = vector.load %arg4[%c0_9, %c0_10] : memref<1x32xf32, #tpu.memory_space<vmem>>, vector<1x32xf32>
    %c0_11 = arith.constant 0 : index
    %c0_12 = arith.constant 0 : index
    %11 = vector.load %arg6[%c0_11, %c0_12] : memref<1x32xf32, #tpu.memory_space<vmem>>, vector<1x32xf32>
    %c0_13 = arith.constant 0 : index
    %c0_14 = arith.constant 0 : index
    %12 = vector.load %arg8[%c0_13, %c0_14] : memref<1x32xf32, #tpu.memory_space<vmem>>, vector<1x32xf32>
    %cst = arith.constant dense<0.000000e+00> : vector<16x32xf32>
    %13 = tpu.matmul %1, %5, %cst {dimension_numbers = #tpu.dot_dimension_numbers<[1], [0], [0], [1], [0, 0, 1, 1], [], []>} : vector<16x32xbf16>, vector<32x32xbf16>, vector<16x32xf32> -> vector<16x32xf32>
    %14 = vector.broadcast %10 : vector<1x32xf32> to vector<16x32xf32>
    %15 = arith.addf %13, %14 : vector<16x32xf32>
    %cst_15 = arith.constant dense<0.000000e+00> : vector<16x32xf32>
    %16 = tpu.matmul %3, %7, %cst_15 {dimension_numbers = #tpu.dot_dimension_numbers<[1], [0], [0], [1], [0, 0, 1, 1], [], []>} : vector<16x32xbf16>, vector<32x32xbf16>, vector<16x32xf32> -> vector<16x32xf32>
    %17 = vector.broadcast %11 : vector<1x32xf32> to vector<16x32xf32>
    %18 = arith.addf %16, %17 : vector<16x32xf32>
    %19 = vector.shape_cast %15 : vector<16x32xf32> to vector<2x8x32xf32>
    %20 = arith.truncf %19 : vector<2x8x32xf32> to vector<2x8x32xbf16>
    %21 = vector.shape_cast %18 : vector<16x32xf32> to vector<2x8x32xf32>
    %22 = arith.truncf %21 : vector<2x8x32xf32> to vector<2x8x32xbf16>
    "tpu.trace_start"() <{level = 10 : i32, message = "bqh,bkh->bqk"}> : () -> ()
    %cst_16 = arith.constant dense<0.000000e+00> : vector<2x8x8xf32>
    %23 = tpu.matmul %22, %20, %cst_16 {dimension_numbers = #tpu.dot_dimension_numbers<[2], [2], [1], [1], [0, 0, 0, 1, 1, 1], [0], [0]>} : vector<2x8x32xbf16>, vector<2x8x32xbf16>, vector<2x8x8xf32> -> vector<2x8x8xf32>
    "tpu.trace_stop"() : () -> ()
    %cst_17 = arith.constant dense<0xFF800000> : vector<2x8xf32>
    %24 = vector.multi_reduction <maximumf>, %23, %cst_17 [2] : vector<2x8x8xf32> to vector<2x8xf32>
    %25 = vector.shape_cast %24 : vector<2x8xf32> to vector<2x8x1xf32>
    %26 = vector.broadcast %25 : vector<2x8x1xf32> to vector<2x8x8xf32>
    %27 = arith.subf %23, %26 : vector<2x8x8xf32>
    %28 = math.exp %27 : vector<2x8x8xf32>
    %cst_18 = arith.constant dense<0.000000e+00> : vector<2x8xf32>
    %29 = vector.multi_reduction <add>, %28, %cst_18 [2] : vector<2x8x8xf32> to vector<2x8xf32>
    %30 = vector.shape_cast %29 : vector<2x8xf32> to vector<2x8x1xf32>
    %31 = tpu.reciprocal %30 {approx = true} : vector<2x8x1xf32> -> vector<2x8x1xf32>
    %32 = vector.broadcast %31 : vector<2x8x1xf32> to vector<2x8x8xf32>
    %33 = arith.mulf %28, %32 : vector<2x8x8xf32>
    %34 = arith.truncf %33 : vector<2x8x8xf32> to vector<2x8x8xbf16>
    "tpu.trace_start"() <{level = 10 : i32, message = "bqk,bkh->bqh"}> : () -> ()
    %cst_19 = arith.constant dense<0.000000e+00> : vector<2x8x32xf32>
    %35 = tpu.matmul %34, %20, %cst_19 {dimension_numbers = #tpu.dot_dimension_numbers<[2], [1], [1], [2], [0, 0, 0, 1, 1, 2], [0], [0]>} : vector<2x8x8xbf16>, vector<2x8x32xbf16>, vector<2x8x32xf32> -> vector<2x8x32xf32>
    "tpu.trace_stop"() : () -> ()
    %36 = vector.shape_cast %35 : vector<2x8x32xf32> to vector<16x32xf32>
    %37 = arith.truncf %36 : vector<16x32xf32> to vector<16x32xbf16>
    %cst_20 = arith.constant dense<0.000000e+00> : vector<16x32xf32>
    %38 = tpu.matmul %37, %9, %cst_20 {dimension_numbers = #tpu.dot_dimension_numbers<[1], [0], [0], [1], [0, 0, 1, 1], [], []>} : vector<16x32xbf16>, vector<32x32xbf16>, vector<16x32xf32> -> vector<16x32xf32>
    %39 = vector.broadcast %12 : vector<1x32xf32> to vector<16x32xf32>
    %40 = arith.addf %38, %39 : vector<16x32xf32>
    %c0_21 = arith.constant 0 : index
    %c0_22 = arith.constant 0 : index
    %41 = vector.load %arg9[%c0_21, %c0_22] : memref<16x32xf32, #tpu.memory_space<vmem>>, vector<16x32xf32>
    tpu.vector_store %arg9[%c0_21, %c0_22], %40 {strides = array<i32>} : memref<16x32xf32, #tpu.memory_space<vmem>>, vector<16x32xf32>,
    %c0_23 = arith.constant 0 : index
    %c0_24 = arith.constant 0 : index
    %c0_25 = arith.constant 0 : index
    %42 = vector.load %arg10[%c0_23, %c0_24, %c0_25] : memref<2x8x8xf32, #tpu.memory_space<vmem>>, vector<2x8x8xf32>
    tpu.vector_store %arg10[%c0_23, %c0_24, %c0_25], %33 {strides = array<i32>} : memref<2x8x8xf32, #tpu.memory_space<vmem>>, vector<2x8x8xf32>,
    return
  }
  func.func @transform_0(%arg0: i32) -> (i32, i32) {
    %c0_i32 = arith.constant 0 : i32
    %c0_i32_0 = arith.constant 0 : i32
    return %arg0, %c0_i32 : i32, i32
  }
  func.func @transform_1(%arg0: i32) -> (i32, i32) {
    %c0_i32 = arith.constant 0 : i32
    %c0_i32_0 = arith.constant 0 : i32
    return %arg0, %c0_i32 : i32, i32
  }
  func.func @transform_2(%arg0: i32) -> (i32, i32) {
    %c0_i32 = arith.constant 0 : i32
    %c0_i32_0 = arith.constant 0 : i32
    %c0_i32_1 = arith.constant 0 : i32
    return %c0_i32, %c0_i32_0 : i32, i32
  }
  func.func @transform_3(%arg0: i32) -> (i32, i32) {
    %c0_i32 = arith.constant 0 : i32
    %c0_i32_0 = arith.constant 0 : i32
    %c0_i32_1 = arith.constant 0 : i32
    return %c0_i32, %c0_i32_0 : i32, i32
  }
  func.func @transform_4(%arg0: i32) -> (i32, i32) {
    %c0_i32 = arith.constant 0 : i32
    %c0_i32_0 = arith.constant 0 : i32
    %c0_i32_1 = arith.constant 0 : i32
    return %c0_i32, %c0_i32_0 : i32, i32
  }
  func.func @transform_5(%arg0: i32) -> (i32, i32) {
    %c0_i32 = arith.constant 0 : i32
    %c0_i32_0 = arith.constant 0 : i32
    %c0_i32_1 = arith.constant 0 : i32
    return %c0_i32, %c0_i32_0 : i32, i32
  }
  func.func @transform_6(%arg0: i32) -> (i32, i32) {
    %c0_i32 = arith.constant 0 : i32
    %c0_i32_0 = arith.constant 0 : i32
    %c0_i32_1 = arith.constant 0 : i32
    return %c0_i32, %c0_i32_0 : i32, i32
  }
  func.func @transform_7(%arg0: i32) -> (i32, i32) {
    %c0_i32 = arith.constant 0 : i32
    %c0_i32_0 = arith.constant 0 : i32
    %c0_i32_1 = arith.constant 0 : i32
    return %c0_i32, %c0_i32_0 : i32, i32
  }
  func.func @transform_8(%arg0: i32) -> (i32, i32) {
    %c0_i32 = arith.constant 0 : i32
    %c0_i32_0 = arith.constant 0 : i32
    return %arg0, %c0_i32 : i32, i32
  }
  func.func @transform_9(%arg0: i32) -> (i32, i32, i32) {
    %c0_i32 = arith.constant 0 : i32
    %c0_i32_0 = arith.constant 0 : i32
    %c0_i32_1 = arith.constant 0 : i32
    return %arg0, %c0_i32, %c0_i32_0 : i32, i32, i32
  }
}

</mosaic_0001>

<llo_original>
// kernel: tpu_custom_call.1
$region0: #{tpu_custom_call.1}
  #allocation0 [shape = 'u32[]', space=smem, size = 0x4, offset = 0x4, fixed_abs, tag = 'smem constant byte address 0x4 - core index']
  #allocation1 [shape = 'u32[72,128]{1,0:T(1,128)}', space=vmem, size = 0x9000, scoped, tag = 'internal scratch']
  %s0 = inlined_call_operand.hbm [shape: f32[16,32], index: 0, kind: input, shape index: {}]
  %s1 = inlined_call_operand.hbm [shape: f32[16,32], index: 1, kind: input, shape index: {}]
  %s2 = inlined_call_operand.hbm [shape: f32[32,32], index: 2, kind: input, shape index: {}]
  %s3 = inlined_call_operand.vmem [shape: f32[1,32], index: 3, kind: input, shape index: {}]
  %s4 = inlined_call_operand.hbm [shape: f32[32,32], index: 4, kind: input, shape index: {}]
  %s5 = inlined_call_operand.vmem [shape: f32[1,32], index: 5, kind: input, shape index: {}]
  %s6 = inlined_call_operand.hbm [shape: f32[32,32], index: 6, kind: input, shape index: {}]
  %s7 = inlined_call_operand.vmem [shape: f32[1,32], index: 7, kind: input, shape index: {}]
  %s8 = inlined_call_operand.hbm [shape: f32[16,32], index: 8, kind: output, shape index: {0}]
  %s9 = inlined_call_operand.hbm [shape: f32[2,8,8], index: 9, kind: output, shape index: {1}]
  %10 = xla_tuple %s8, %s9
  %s11 = sld [smem:[#allocation0]]
  $region70: #{tpu_custom_call.1} parent=0
    _
  %s13 = ssub.s32 1, %s11
  %s14 = scalar_select 0, %s13, %s11
  $region1: #{tpu_custom_call.1} parent=0
    #allocation2 [shape = 'u8[8192]{0}', space=vmem, size = 0x2000, scoped, tag = 'input window, operand 0, single buffered']
    #allocation3 [shape = 's32[1]{0}', space=sflag, size = 0x4, scoped, tag = 'scoped memory for tpu_custom_call.1']
    #allocation4 [shape = 's32[1]{0}', space=sflag, size = 0x4, scoped, tag = 'scoped memory for tpu_custom_call.1']
    #allocation5 [shape = 'u8[8192]{0}', space=vmem, size = 0x2000, scoped, tag = 'input window, operand 1, single buffered']
    #allocation6 [shape = 's32[1]{0}', space=sflag, size = 0x4, scoped, tag = 'scoped memory for tpu_custom_call.1']
    #allocation7 [shape = 'u8[16384]{0}', space=vmem, size = 0x4000, scoped, tag = 'input window, operand 2, single buffered']
    #allocation8 [shape = 'u8[16384]{0}', space=vmem, size = 0x4000, scoped, tag = 'input window, operand 4, single buffered']
    #allocation9 [shape = 's32[1]{0}', space=sflag, size = 0x4, scoped, tag = 'scoped memory for tpu_custom_call.1']
    #allocation10 [shape = 'u8[16384]{0}', space=vmem, size = 0x4000, scoped, tag = 'input window, operand 6, single buffered']
    #allocation11 [shape = 'u8[8192]{0}', space=vmem, size = 0x2000, scoped, tag = 'output window, operand 0, single buffered']
    #allocation12 [shape = 'u8[8192]{0}', space=vmem, size = 0x2000, scoped, tag = 'output window, operand 1, single buffered']
    #allocation13 [shape = 's32[1]{0}', space=sflag, size = 0x4, scoped, tag = 'scoped memory for tpu_custom_call.1']
    %15 = vsyncpa [#allocation3], 0
    %16 = vsyncpa [#allocation6], 0
    %17 = vsyncpa [#allocation9], 0
    %18 = vsyncpa [#allocation4], 0
    %19 = vsyncpa [#allocation13], 0
    // Predicated region
    $region2: #{tpu_custom_call.1} parent=1 // pred_check
      _
    $region3: #{tpu_custom_call.1} parent=1 // pred_check_branch
      %21 = sbr.rel (0) target = $region5
    $region4: #{tpu_custom_call.1} parent=1 // pred_region
      %23 = vsyncadd [#allocation3], 0
      %s24 = sshll.u32 %s0, 4
      %s25 = int_to_ptr.hbm [resolvable:$true] %s24
      %s26 = sshll.u32 [#allocation2], 4
      %s27 = int_to_ptr.vmem [resolvable:$true] %s26
      %32 = dma.hbm_to_vmem [thread:$0]  %s25, 256, %s27, [#allocation3], 128, 128, 8
    $region5: #{tpu_custom_call.1} parent=1 // pred_fallthru
      _
    // Predicated region
    $region6: #{tpu_custom_call.1} parent=1 // pred_check
      _
    $region7: #{tpu_custom_call.1} parent=1 // pred_check_branch
      %34 = sbr.rel (0) target = $region9
    $region8: #{tpu_custom_call.1} parent=1 // pred_region
      %36 = vsyncadd [#allocation6], 0
      %s37 = sshll.u32 %s1, 4
      %s38 = int_to_ptr.hbm [resolvable:$true] %s37
      %s39 = sshll.u32 [#allocation5], 4
      %s40 = int_to_ptr.vmem [resolvable:$true] %s39
      %45 = dma.hbm_to_vmem [thread:$0]  %s38, 256, %s40, [#allocation6], 128, 128, 8
    $region9: #{tpu_custom_call.1} parent=1 // pred_fallthru
      _
    // Predicated region
    $region10: #{tpu_custom_call.1} parent=1 // pred_check
      _
    $region11: #{tpu_custom_call.1} parent=1 // pred_check_branch
      %47 = sbr.rel (0) target = $region13
    $region12: #{tpu_custom_call.1} parent=1 // pred_region
      %49 = vsyncadd [#allocation6], 0
      %s50 = sshll.u32 %s2, 4
      %s51 = int_to_ptr.hbm [resolvable:$true] %s50
      %s52 = sshll.u32 [#allocation7], 4
      %s53 = int_to_ptr.vmem [resolvable:$true] %s52
      %58 = dma.hbm_to_vmem [thread:$0]  %s51, 512, %s53, [#allocation6], 128, 128, 8
    $region13: #{tpu_custom_call.1} parent=1 // pred_fallthru
      _
    // Predicated region
    $region14: #{tpu_custom_call.1} parent=1 // pred_check
      _
    $region15: #{tpu_custom_call.1} parent=1 // pred_check_branch
      %60 = sbr.rel (0) target = $region17
    $region16: #{tpu_custom_call.1} parent=1 // pred_region
      _
    $region17: #{tpu_custom_call.1} parent=1 // pred_fallthru
      _
    // Predicated region
    $region18: #{tpu_custom_call.1} parent=1 // pred_check
      _
    $region19: #{tpu_custom_call.1} parent=1 // pred_check_branch
      %62 = sbr.rel (0) target = $region21
    $region20: #{tpu_custom_call.1} parent=1 // pred_region
      %64 = vsyncadd [#allocation9], 0
      %s65 = sshll.u32 %s4, 4
      %s66 = int_to_ptr.hbm [resolvable:$true] %s65
      %s67 = sshll.u32 [#allocation8], 4
      %s68 = int_to_ptr.vmem [resolvable:$true] %s67
      %73 = dma.hbm_to_vmem [thread:$0]  %s66, 512, %s68, [#allocation9], 128, 128, 8
    $region21: #{tpu_custom_call.1} parent=1 // pred_fallthru
      _
    // Predicated region
    $region22: #{tpu_custom_call.1} parent=1 // pred_check
      _
    $region23: #{tpu_custom_call.1} parent=1 // pred_check_branch
      %75 = sbr.rel (0) target = $region25
    $region24: #{tpu_custom_call.1} parent=1 // pred_region
      _
    $region25: #{tpu_custom_call.1} parent=1 // pred_fallthru
      _
    // Predicated region
    $region26: #{tpu_custom_call.1} parent=1 // pred_check
      _
    $region27: #{tpu_custom_call.1} parent=1 // pred_check_branch
      %77 = sbr.rel (0) target = $region29
    $region28: #{tpu_custom_call.1} parent=1 // pred_region
      %79 = vsyncadd [#allocation9], 0
      %s80 = sshll.u32 %s6, 4
      %s81 = int_to_ptr.hbm [resolvable:$true] %s80
      %s82 = sshll.u32 [#allocation10], 4
      %s83 = int_to_ptr.vmem [resolvable:$true] %s82
      %88 = dma.hbm_to_vmem [thread:$0]  %s81, 512, %s83, [#allocation9], 128, 128, 8
    $region29: #{tpu_custom_call.1} parent=1 // pred_fallthru
      _
    // Predicated region
    $region30: #{tpu_custom_call.1} parent=1 // pred_check
      _
    $region31: #{tpu_custom_call.1} parent=1 // pred_check_branch
      %90 = sbr.rel (0) target = $region33
    $region32: #{tpu_custom_call.1} parent=1 // pred_region
      _
    $region33: #{tpu_custom_call.1} parent=1 // pred_fallthru
      _
    // Predicated region
    $region34: #{tpu_custom_call.1} parent=1 // pred_check
      _
    $region35: #{tpu_custom_call.1} parent=1 // pred_check_branch
      %92 = sbr.rel (0) target = $region37
    $region36: #{tpu_custom_call.1} parent=1 // pred_region
      %94 = dma.done [#allocation3], 256
    $region37: #{tpu_custom_call.1} parent=1 // pred_fallthru
      _
    // Predicated region
    $region38: #{tpu_custom_call.1} parent=1 // pred_check
      _
    $region39: #{tpu_custom_call.1} parent=1 // pred_check_branch
      %96 = sbr.rel (0) target = $region41
    $region40: #{tpu_custom_call.1} parent=1 // pred_region
      %98 = dma.done [#allocation6], 256
    $region41: #{tpu_custom_call.1} parent=1 // pred_fallthru
      _
    // Predicated region
    $region42: #{tpu_custom_call.1} parent=1 // pred_check
      _
    $region43: #{tpu_custom_call.1} parent=1 // pred_check_branch
      %100 = sbr.rel (0) target = $region45
    $region44: #{tpu_custom_call.1} parent=1 // pred_region
      %102 = dma.done [#allocation6], 512
    $region45: #{tpu_custom_call.1} parent=1 // pred_fallthru
      _
    // Predicated region
    $region46: #{tpu_custom_call.1} parent=1 // pred_check
      _
    $region47: #{tpu_custom_call.1} parent=1 // pred_check_branch
      %104 = sbr.rel (0) target = $region49
    $region48: #{tpu_custom_call.1} parent=1 // pred_region
      %106 = dma.done [#allocation9], 512
    $region49: #{tpu_custom_call.1} parent=1 // pred_fallthru
      _
    // Predicated region
    $region50: #{tpu_custom_call.1} parent=1 // pred_check
      _
    $region51: #{tpu_custom_call.1} parent=1 // pred_check_branch
      %108 = sbr.rel (0) target = $region53
    $region52: #{tpu_custom_call.1} parent=1 // pred_region
      %110 = dma.done [#allocation9], 512
    $region53: #{tpu_custom_call.1} parent=1 // pred_fallthru
      _
    %v112 = vld [vmem:[#allocation2] sm:$0xff]
    %v113 = vld [vmem:[#allocation2 + $0x8] sm:$0xff]
    %v114 = vpack.c.bf16 %v113, %v112
    %v115 = vld [vmem:[#allocation5] sm:$0xff]
    %v116 = vld [vmem:[#allocation5 + $0x8] sm:$0xff]
    %v117 = vpack.c.bf16 %v116, %v115
    %v118 = vld [vmem:[#allocation7] sm:$0xff]
    %v119 = vld [vmem:[#allocation7 + $0x8] sm:$0xff]
    %v120 = vld [vmem:[#allocation7 + $0x10] sm:$0xff]
    %v121 = vld [vmem:[#allocation7 + $0x18] sm:$0xff]
    %v122 = vpack.c.bf16 %v119, %v118
    %v123 = vpack.c.bf16 %v121, %v120
    %v124 = vld [vmem:[#allocation8] sm:$0xff]
    %v125 = vld [vmem:[#allocation8 + $0x8] sm:$0xff]
    %v126 = vld [vmem:[#allocation8 + $0x10] sm:$0xff]
    %v127 = vld [vmem:[#allocation8 + $0x18] sm:$0xff]
    %v128 = vpack.c.bf16 %v125, %v124
    %v129 = vpack.c.bf16 %v127, %v126
    %v130 = vld [vmem:[#allocation10] sm:$0xff]
    %v131 = vld [vmem:[#allocation10 + $0x8] sm:$0xff]
    %v132 = vld [vmem:[#allocation10 + $0x10] sm:$0xff]
    %v133 = vld [vmem:[#allocation10 + $0x18] sm:$0xff]
    %v134 = vpack.c.bf16 %v131, %v130
    %v135 = vpack.c.bf16 %v133, %v132
    %v136 = vld [vmem:[%s3] sm:$0x1]
    %v137 = vld [vmem:[%s5] sm:$0x1]
    %v138 = vld [vmem:[%s7] sm:$0x1]
    %v140 = vperm.slane %v136, 0
    %vm142 = vcmask 261120
    %v144 = vsel %vm142, %v114, 0
    %146 = vmatpush.bf16.msra.mxu0 0
    %147 = vmatpush.bf16.msra.mxu0 0
    %148 = vmatpush.bf16.msra.mxu0 0
    %149 = vmatpush.bf16.msra.mxu0 0
    %150 = vmatpush.bf16.msra.mxu0 0
    %151 = vmatpush.bf16.msra.mxu0 0
    %152 = vmatpush.bf16.msra.mxu0 %v123
    %153 = vmatpush.bf16.msra.mxu0 %v122
    %154 = vmatmul.bf16.gmra.mxu0 %v144
    %v155 = vpop.f32.mrf.mxu0
    %v156 = vadd.f32 %v140, %v155
    %v157 = vpop.f32.mrf.mxu0
    %v158 = vadd.f32 %v140, %v157
    %159 = vdwg.mxu0
    %v161 = vperm.slane %v137, 0
    %v164 = vsel %vm142, %v117, 0
    %166 = vmatpush.bf16.msra.mxu0 0
    %167 = vmatpush.bf16.msra.mxu0 0
    %168 = vmatpush.bf16.msra.mxu0 0
    %169 = vmatpush.bf16.msra.mxu0 0
    %170 = vmatpush.bf16.msra.mxu0 0
    %171 = vmatpush.bf16.msra.mxu0 0
    %172 = vmatpush.bf16.msra.mxu0 %v129
    %173 = vmatpush.bf16.msra.mxu0 %v128
    %174 = vmatmul.bf16.gmra.mxu0 %v164
    %v175 = vpop.f32.mrf.mxu0
    %v176 = vadd.f32 %v161, %v175
    %v177 = vpop.f32.mrf.mxu0
    %v178 = vadd.f32 %v161, %v177
    %179 = vdwg.mxu0
    %v180 = vpack.c.bf16 %v156, %v156
    %v181 = vpack.c.bf16 %v158, %v158
    %v182 = vpack.c.bf16 %v176, %v176
    %v183 = vpack.c.bf16 %v178, %v178
    %v185 = vsel %vm142, %v182, 0
    %v188 = vsel %vm142, %v180, 0
    %190 = vmatpush.bf16.xpose.msra.mxu0 0
    %191 = vmatpush.bf16.xpose.msra.mxu0 0
    %192 = vmatpush.bf16.xpose.msra.mxu0 0
    %193 = vmatpush.bf16.xpose.msra.mxu0 0
    %194 = vmatpush.bf16.xpose.msra.mxu0 0
    %195 = vmatpush.bf16.xpose.msra.mxu0 0
    %196 = vmatpush.bf16.xpose.msra.mxu0 0
    %197 = vmatpush.bf16.xpose.msra.mxu0 %v188
    %198 = vmatmul.bf16.gmra.mxu0 %v185
    %v199 = vpop.f32.mrf.mxu0
    %v200 = vadd.f32 0.0, %v199
    %v201 = vpop.f32.mrf.mxu0
    %202 = vdwg.mxu0
    %v204 = vsel %vm142, %v183, 0
    %v207 = vsel %vm142, %v181, 0
    %209 = vmatpush.bf16.xpose.msra.mxu0 0
    %210 = vmatpush.bf16.xpose.msra.mxu0 0
    %211 = vmatpush.bf16.xpose.msra.mxu0 0
    %212 = vmatpush.bf16.xpose.msra.mxu0 0
    %213 = vmatpush.bf16.xpose.msra.mxu0 0
    %214 = vmatpush.bf16.xpose.msra.mxu0 0
    %215 = vmatpush.bf16.xpose.msra.mxu0 0
    %216 = vmatpush.bf16.xpose.msra.mxu0 %v207
    %217 = vmatmul.bf16.gmra.mxu0 %v204
    %v218 = vpop.f32.mrf.mxu0
    %v219 = vadd.f32 0.0, %v218
    %v220 = vpop.f32.mrf.mxu0
    %221 = vdwg.mxu0
    %vm222 = vcmask 64512
    %v223 = vsel %vm222, %v200, -inf
    %224 = vmax.xlane.f32.xlu0 %v223
    %v225 = vpop.xlane.xlu0 %224
    %v226 = vsel %vm222, %v219, -inf
    %227 = vmax.xlane.f32.xlu0 %v226
    %v228 = vpop.xlane.xlu0 %227
    %v229 = vsub.f32 %v200, %v225
    %v230 = vsub.f32 %v219, %v228
    %v231 = vmul.f32 %v229, 1.442695
    %v232 = vpow.pop %v231
    %v233 = vmul.f32 %v230, 1.442695
    %v234 = vpow.pop %v233
    %v235 = vsel %vm222, %v232, 0.0
    %236 = vadd.xlane.f32.xlu0 %v235
    %v237 = vpop.xlane.xlu0 %236
    %v238 = vsel %vm222, %v234, 0.0
    %239 = vadd.xlane.f32.xlu0 %v238
    %v240 = vpop.xlane.xlu0 %239
    %v241 = vrcp.pop %v237
    %v242 = vrcp.pop %v240
    %v243 = vmul.f32 %v232, %v241
    %v244 = vmul.f32 %v234, %v242
    %v245 = vpack.c.bf16 %v243, %v243
    %v246 = vpack.c.bf16 %v244, %v244
    %v248 = vsel %vm222, %v245, 0
    %vm250 = vcmask 1043456
    %v251 = vsel %vm250, %v180, 0
    %253 = vmatpush.bf16.msra.mxu0 0
    %254 = vmatpush.bf16.msra.mxu0 0
    %255 = vmatpush.bf16.msra.mxu0 0
    %256 = vmatpush.bf16.msra.mxu0 0
    %257 = vmatpush.bf16.msra.mxu0 0
    %258 = vmatpush.bf16.msra.mxu0 0
    %259 = vmatpush.bf16.msra.mxu0 0
    %260 = vmatpush.bf16.msra.mxu0 %v251
    %261 = vmatmul.bf16.gmra.mxu0 %v248
    %v262 = vpop.f32.mrf.mxu0
    %v263 = vadd.f32 0.0, %v262
    %v264 = vpop.f32.mrf.mxu0
    %265 = vdwg.mxu0
    %v267 = vsel %vm222, %v246, 0
    %v269 = vsel %vm250, %v181, 0
    %271 = vmatpush.bf16.msra.mxu0 0
    %272 = vmatpush.bf16.msra.mxu0 0
    %273 = vmatpush.bf16.msra.mxu0 0
    %274 = vmatpush.bf16.msra.mxu0 0
    %275 = vmatpush.bf16.msra.mxu0 0
    %276 = vmatpush.bf16.msra.mxu0 0
    %277 = vmatpush.bf16.msra.mxu0 0
    %278 = vmatpush.bf16.msra.mxu0 %v269
    %279 = vmatmul.bf16.gmra.mxu0 %v267
    %v280 = vpop.f32.mrf.mxu0
    %v281 = vadd.f32 0.0, %v280
    %v282 = vpop.f32.mrf.mxu0
    %283 = vdwg.mxu0
    %v284 = vpack.c.bf16 %v281, %v263
    %v286 = vperm.slane %v138, 0
    %v289 = vsel %vm142, %v284, 0
    %291 = vmatpush.bf16.msra.mxu0 0
    %292 = vmatpush.bf16.msra.mxu0 0
    %293 = vmatpush.bf16.msra.mxu0 0
    %294 = vmatpush.bf16.msra.mxu0 0
    %295 = vmatpush.bf16.msra.mxu0 0
    %296 = vmatpush.bf16.msra.mxu0 0
    %297 = vmatpush.bf16.msra.mxu0 %v135
    %298 = vmatpush.bf16.msra.mxu0 %v134
    %299 = vmatmul.bf16.gmra.mxu0 %v289
    %v300 = vpop.f32.mrf.mxu0
    %v301 = vadd.f32 %v286, %v300
    %v302 = vpop.f32.mrf.mxu0
    %v303 = vadd.f32 %v286, %v302
    %304 = vdwg.mxu0
    %305 = vst.msk [vmem:[#allocation11] sm:$0xff] %vm142, %v301
    %306 = vst.msk [vmem:[#allocation11 + $0x8] sm:$0xff] %vm142, %v303
    %307 = vst.msk [vmem:[#allocation12] sm:$0xff] %vm222, %v243
    %308 = vst.msk [vmem:[#allocation12 + $0x8] sm:$0xff] %vm222, %v244
    // Predicated region
    $region54: #{tpu_custom_call.1} parent=1 // pred_check
      _
    $region55: #{tpu_custom_call.1} parent=1 // pred_check_branch
      %310 = sbr.rel (0) target = $region57
    $region56: #{tpu_custom_call.1} parent=1 // pred_region
      %312 = vsyncadd [#allocation4], 0
      %s313 = sshll.u32 [#allocation11], 4
      %s314 = int_to_ptr.vmem [resolvable:$true] %s313
      %s315 = sshll.u32 %s8, 4
      %s316 = int_to_ptr.hbm [resolvable:$true] %s315
      %321 = dma.vmem_to_hbm [thread:$0]  %s314, 256, %s316, [#allocation4], 128, 128, 8
    $region57: #{tpu_custom_call.1} parent=1 // pred_fallthru
      _
    // Predicated region
    $region58: #{tpu_custom_call.1} parent=1 // pred_check
      _
    $region59: #{tpu_custom_call.1} parent=1 // pred_check_branch
      %323 = sbr.rel (0) target = $region61
    $region60: #{tpu_custom_call.1} parent=1 // pred_region
      %325 = vsyncadd [#allocation13], 0
      %s326 = sshll.u32 [#allocation12], 4
      %s327 = int_to_ptr.vmem [resolvable:$true] %s326
      %s328 = sshll.u32 %s9, 4
      %s329 = int_to_ptr.hbm [resolvable:$true] %s328
      %334 = dma.vmem_to_hbm [thread:$0]  %s327, 256, %s329, [#allocation13], 128, 128, 8
    $region61: #{tpu_custom_call.1} parent=1 // pred_fallthru
      _
    // Predicated region
    $region62: #{tpu_custom_call.1} parent=1 // pred_check
      _
    $region63: #{tpu_custom_call.1} parent=1 // pred_check_branch
      %336 = sbr.rel (0) target = $region65
    $region64: #{tpu_custom_call.1} parent=1 // pred_region
      %338 = dma.done [#allocation4], 256
    $region65: #{tpu_custom_call.1} parent=1 // pred_fallthru
      _
    // Predicated region
    $region66: #{tpu_custom_call.1} parent=1 // pred_check
      _
    $region67: #{tpu_custom_call.1} parent=1 // pred_check_branch
      %340 = sbr.rel (0) target = $region69
    $region68: #{tpu_custom_call.1} parent=1 // pred_region
      %342 = dma.done [#allocation13], 256
    $region69: #{tpu_custom_call.1} parent=1 // pred_fallthru
      _
    %343 = vsyncpa [#allocation3], 1
    %344 = vsyncpa [#allocation6], 1
    %345 = vsyncpa [#allocation9], 1
    %346 = vsyncpa [#allocation4], 1
    %347 = vsyncpa [#allocation13], 1

</llo_original>
